<compile_context>
chip_gen: v5e
topology: v5e:2x2
jax: 0.10.0
libtpu: 0.0.40
codegen_flags: <defaults>
</compile_context>

<pallas_src>
import functools

import jax
import jax.numpy as jnp
from jax.experimental import pallas as pl
from jax.experimental.pallas import tpu as pltpu


def _lstm_kernel(x_ref, h0_ref, c0_ref, wih_ref, whh_ref, b_ref,
                 out_ref, hn_ref, cn_ref, *, T, B, H):
    """Whole sequence resident in VMEM; recurrence fully unrolled over T."""
    G = 4 * H

    # ---- hoisted input projection: one MXU matmul covering ALL timesteps ---------
    # x_ref is (B, T, I) batch-first; collapsing the leading dims is a no-op relayout.
    x2 = x_ref[...].reshape(B * T, x_ref.shape[-1])                  # (B*T, I)
    gx = (jnp.dot(x2, wih_ref[...], preferred_element_type=jnp.float32)
          + b_ref[...])                                              # (B*T, 4H)
    gx3 = gx.reshape(B, T, G)                                        # row b*T+t -> [b, t]

    whh = whh_ref[...]                                               # (H, 4H), loaded once
    h = h0_ref[...].astype(jnp.float32)                              # (B, H)
    c = c0_ref[...].astype(jnp.float32)                              # (B, H)

    # ---- single-tanh activation constants (hoisted, built directly at (B, 4H)) ----
    # sigmoid(x) = 0.5 * tanh(0.5 * x) + 0.5 on the i/f/o lanes; plain tanh on g lanes.
    lane = jax.lax.broadcasted_iota(jnp.int32, (B, G), 1)
    is_g = (lane >= 2 * H) & (lane < 3 * H)
    a_scale = jnp.where(is_g, jnp.float32(1.0), jnp.float32(0.5))    # pre-scale == post-mul
    a_add = jnp.where(is_g, jnp.float32(0.0), jnp.float32(0.5))

    # ---- serial recurrence, fully unrolled (T is small & static) ------------------
    for t in range(T):
        gates = gx3[:, t, :] + jnp.dot(h, whh,
                                       preferred_element_type=jnp.float32)  # (B, 4H)
        act = jnp.tanh(gates * a_scale) * a_scale + a_add            # one EUP tanh
        i_g = act[:, 0 * H:1 * H]
        f_g = act[:, 1 * H:2 * H]
        g_g = act[:, 2 * H:3 * H]
        o_g = act[:, 3 * H:4 * H]
        c = f_g * c + i_g * g_g
        h = o_g * jnp.tanh(c)
        # masked vst on the idle store slot; final HBM writeback is one (B, T*H) DMA.
        out_ref[:, t * H:(t + 1) * H] = h.astype(out_ref.dtype)

    hn_ref[...] = h.astype(hn_ref.dtype)                             # written once
    cn_ref[...] = c.astype(cn_ref.dtype)


def prepare_lstm_params(w_ih, w_hh, b_ih, b_hh):
    """One-time parameter prep (outside the per-call path): transpose + bias fusion."""
    g = w_ih.shape[0]                       # 4H
    wih_t = jnp.transpose(w_ih)             # (I, 4H)
    whh_t = jnp.transpose(w_hh)             # (H, 4H)
    b = (b_ih + b_hh).reshape(1, g)         # (1, 4H) fused bias
    return wih_t, whh_t, b


def _vmem_limit_bytes(B, T, I, H, itemsize=4):
    """Explicit VMEM scaling guard (v7x has only 64 MiB physical VMEM)."""
    resident = itemsize * (
        B * T * I            # x
        + I * 4 * H          # W_ih^T
        + H * 4 * H          # W_hh^T
        + 4 * H              # fused bias
        + B * T * 4 * H      # hoisted projection gx
        + B * T * H          # output slab
        + 4 * B * H)         # h0, c0, h_n, c_n
    # 4x headroom for compiler temporaries; floor 8 MiB, cap safely below v7x VMEM.
    return int(min(max(4 * resident, 8 << 20), 48 << 20))


def lstm_forward(x_btI, h0_1bh, c0_1bh, prepared_params):
    """x_btI: (B, T, I) float32. Returns (output (B,T,H), (h_n (1,B,H), c_n (1,B,H)))."""
    wih_t, whh_t, b = prepared_params
    B, T, I = x_btI.shape
    H = whh_t.shape[0]                      # whh_t: (H, 4H)

    h0 = h0_1bh[0]                          # (B, H) — free leading-dim slice
    c0 = c0_1bh[0]

    vmem = pl.BlockSpec(memory_space=pltpu.MemorySpace.VMEM)  # whole array resident

    out2d, h_n, c_n = pl.pallas_call(
        functools.partial(_lstm_kernel, T=T, B=B, H=H),
        out_shape=(
            jax.ShapeDtypeStruct((B, T * H), x_btI.dtype),    # lane-dense output slab
            jax.ShapeDtypeStruct((B, H), x_btI.dtype),        # h_n
            jax.ShapeDtypeStruct((B, H), x_btI.dtype),        # c_n
        ),
        in_specs=[vmem] * 6,
        out_specs=(vmem, vmem, vmem),
        compiler_params=pltpu.CompilerParams(
            vmem_limit_bytes=_vmem_limit_bytes(B, T, I, H)),
    )(x_btI, h0, c0, wih_t, whh_t, b)

    output_bth = out2d.reshape(B, T, H)                       # free reshape
    return output_bth, (h_n[None, ...], c_n[None, ...])


@functools.partial(jax.jit, static_argnames=("layer",))
def encoder_forward(data, hidden, prepared_params, layer=1):
    """Mirrors Encoder.forward: runs the (single) LSTM `layer` times with updated hidden."""
    output = None
    for _ in range(layer):
        output, hidden = lstm_forward(data, hidden[0], hidden[1], prepared_params)
    return output, hidden


def encoder_init_hidden(batch_size, hidden_size, dtype=jnp.float32):
    # Encoder.init_hidden: zeros of shape (1, batch, hidden)
    return (jnp.zeros((1, batch_size, hidden_size), dtype),
            jnp.zeros((1, batch_size, hidden_size), dtype))


def _reference_lstm(x, h0, c0, w_ih, w_hh, b_ih, b_hh):
    """Pure-JAX reference (lax.scan) for correctness check."""
    H = w_hh.shape[1]

    def step(carry, x_t):
        h, c = carry
        gates = x_t @ w_ih.T + h @ w_hh.T + b_ih + b_hh
        i = jax.nn.sigmoid(gates[:, 0 * H:1 * H])
        f = jax.nn.sigmoid(gates[:, 1 * H:2 * H])
        g = jnp.tanh(gates[:, 2 * H:3 * H])
        o = jax.nn.sigmoid(gates[:, 3 * H:4 * H])
        c = f * c + i * g
        h = o * jnp.tanh(c)
        return (h, c), h

    (hn, cn), out = jax.lax.scan(step, (h0[0], c0[0]),
                                 jnp.transpose(x, (1, 0, 2)))
    return jnp.transpose(out, (1, 0, 2)), (hn[None], cn[None])


if __name__ == "__main__":
    # small shapes consistent with the module: batch=2, seq=8, input=16, hidden=32
    B, T, I, H = 2, 8, 16, 32
    key = jax.random.PRNGKey(0)
    k_x, k1, k2, k3, k4 = jax.random.split(key, 5)

    # deterministic parameter init (same shapes as nn.LSTM(input, hidden, 1))
    bound = 1.0 / jnp.sqrt(H)
    w_ih = jax.random.uniform(k1, (4 * H, I), jnp.float32, -bound, bound)
    w_hh = jax.random.uniform(k2, (4 * H, H), jnp.float32, -bound, bound)
    b_ih = jax.random.uniform(k3, (4 * H,), jnp.float32, -bound, bound)
    b_hh = jax.random.uniform(k4, (4 * H,), jnp.float32, -bound, bound)

    # one-time parameter prep: outside the per-call path (no per-call transpose/add ops)
    prepared = prepare_lstm_params(w_ih, w_hh, b_ih, b_hh)

    data = jax.random.normal(k_x, (B, T, I), jnp.float32)
    hidden = encoder_init_hidden(B, H)

    output, (h_n, c_n) = encoder_forward(data, hidden, prepared, layer=1)
    output = jax.block_until_ready(output)
    h_n = jax.block_until_ready(h_n)
    c_n = jax.block_until_ready(c_n)

    # correctness check vs pure-JAX reference (raw torch-layout params)
    ref_out, (ref_hn, ref_cn) = _reference_lstm(data, hidden[0], hidden[1],
                                                w_ih, w_hh, b_ih, b_hh)
    assert jnp.allclose(output, ref_out, atol=1e-5, rtol=1e-5)
    assert jnp.allclose(h_n, ref_hn, atol=1e-5, rtol=1e-5)
    assert jnp.allclose(c_n, ref_cn, atol=1e-5, rtol=1e-5)

    print("KERNEL_OK")
</pallas_src>

<mosaic_0001>
module attributes {stable_mosaic.version = 11 : i64} {
  func.func @_lstm_kernel(%arg0: memref<2x8x16xf32, #tpu.memory_space<vmem>>, %arg1: memref<2x32xf32, #tpu.memory_space<vmem>>, %arg2: memref<2x32xf32, #tpu.memory_space<vmem>>, %arg3: memref<16x128xf32, #tpu.memory_space<vmem>>, %arg4: memref<32x128xf32, #tpu.memory_space<vmem>>, %arg5: memref<1x128xf32, #tpu.memory_space<vmem>>, %arg6: memref<2x256xf32, #tpu.memory_space<vmem>>, %arg7: memref<2x32xf32, #tpu.memory_space<vmem>>, %arg8: memref<2x32xf32, #tpu.memory_space<vmem>>) attributes {dimension_semantics = [], scalar_prefetch = 0 : i64, scratch_operands = 0 : i64, tpu.core_type = #tpu.core_type<tc>} {
    %c0 = arith.constant 0 : index
    %c0_0 = arith.constant 0 : index
    %c0_1 = arith.constant 0 : index
    %0 = vector.load %arg0[%c0, %c0_0, %c0_1] : memref<2x8x16xf32, #tpu.memory_space<vmem>>, vector<2x8x16xf32>
    %1 = vector.shape_cast %0 : vector<2x8x16xf32> to vector<16x16xf32>
    %c0_2 = arith.constant 0 : index
    %c0_3 = arith.constant 0 : index
    %2 = vector.load %arg3[%c0_2, %c0_3] : memref<16x128xf32, #tpu.memory_space<vmem>>, vector<16x128xf32>
    %cst = arith.constant dense<0.000000e+00> : vector<16x128xf32>
    %3 = tpu.matmul %1, %2, %cst {dimension_numbers = #tpu.dot_dimension_numbers<[1], [0], [0], [1], [0, 0, 1, 1], [], []>} : vector<16x16xf32>, vector<16x128xf32>, vector<16x128xf32> -> vector<16x128xf32>
    %c0_4 = arith.constant 0 : index
    %c0_5 = arith.constant 0 : index
    %4 = vector.load %arg5[%c0_4, %c0_5] : memref<1x128xf32, #tpu.memory_space<vmem>>, vector<1x128xf32>
    %5 = vector.broadcast %4 : vector<1x128xf32> to vector<16x128xf32>
    %6 = arith.addf %3, %5 : vector<16x128xf32>
    %7 = vector.shape_cast %6 : vector<16x128xf32> to vector<2x8x128xf32>
    %c0_6 = arith.constant 0 : index
    %c0_7 = arith.constant 0 : index
    %8 = vector.load %arg4[%c0_6, %c0_7] : memref<32x128xf32, #tpu.memory_space<vmem>>, vector<32x128xf32>
    %c0_8 = arith.constant 0 : index
    %c0_9 = arith.constant 0 : index
    %9 = vector.load %arg1[%c0_8, %c0_9] : memref<2x32xf32, #tpu.memory_space<vmem>>, vector<2x32xf32>
    %c0_10 = arith.constant 0 : index
    %c0_11 = arith.constant 0 : index
    %10 = vector.load %arg2[%c0_10, %c0_11] : memref<2x32xf32, #tpu.memory_space<vmem>>, vector<2x32xf32>
    %11 = tpu.iota {dimensions = array<i32: 1>} : vector<2x128xi32>
    %c64_i32 = arith.constant 64 : i32
    %12 = vector.broadcast %c64_i32 : i32 to vector<2x128xi32>
    %13 = arith.cmpi sge, %11, %12 : vector<2x128xi32>
    %c96_i32 = arith.constant 96 : i32
    %14 = vector.broadcast %c96_i32 : i32 to vector<2x128xi32>
    %15 = arith.cmpi slt, %11, %14 : vector<2x128xi32>
    %16 = arith.andi %13, %15 : vector<2x128xi1>
    %cst_12 = arith.constant 1.000000e+00 : f32
    %cst_13 = arith.constant 5.000000e-01 : f32
    %17 = vector.broadcast %cst_12 : f32 to vector<2x128xf32>
    %18 = vector.broadcast %cst_13 : f32 to vector<2x128xf32>
    %19 = arith.select %16, %17, %18 : vector<2x128xi1>, vector<2x128xf32>
    %cst_14 = arith.constant 0.000000e+00 : f32
    %cst_15 = arith.constant 5.000000e-01 : f32
    %20 = vector.broadcast %cst_14 : f32 to vector<2x128xf32>
    %21 = vector.broadcast %cst_15 : f32 to vector<2x128xf32>
    %22 = arith.select %16, %20, %21 : vector<2x128xi1>, vector<2x128xf32>
    %23 = vector.extract_strided_slice %7 {offsets = [0, 0, 0], sizes = [2, 1, 128], strides = [1, 1, 1]} : vector<2x8x128xf32> to vector<2x1x128xf32>
    %24 = vector.shape_cast %23 : vector<2x1x128xf32> to vector<2x128xf32>
    %cst_16 = arith.constant dense<0.000000e+00> : vector<2x128xf32>
    %25 = tpu.matmul %9, %8, %cst_16 {dimension_numbers = #tpu.dot_dimension_numbers<[1], [0], [0], [1], [0, 0, 1, 1], [], []>} : vector<2x32xf32>, vector<32x128xf32>, vector<2x128xf32> -> vector<2x128xf32>
    %26 = arith.addf %24, %25 : vector<2x128xf32>
    %27 = arith.mulf %26, %19 : vector<2x128xf32>
    %28 = math.tanh %27 : vector<2x128xf32>
    %29 = arith.mulf %28, %19 : vector<2x128xf32>
    %30 = arith.addf %29, %22 : vector<2x128xf32>
    %31 = vector.extract_strided_slice %30 {offsets = [0, 0], sizes = [2, 32], strides = [1, 1]} : vector<2x128xf32> to vector<2x32xf32>
    %32 = vector.extract_strided_slice %30 {offsets = [0, 32], sizes = [2, 32], strides = [1, 1]} : vector<2x128xf32> to vector<2x32xf32>
    %33 = vector.extract_strided_slice %30 {offsets = [0, 64], sizes = [2, 32], strides = [1, 1]} : vector<2x128xf32> to vector<2x32xf32>
    %34 = vector.extract_strided_slice %30 {offsets = [0, 96], sizes = [2, 32], strides = [1, 1]} : vector<2x128xf32> to vector<2x32xf32>
    %35 = arith.mulf %32, %10 : vector<2x32xf32>
    %36 = arith.mulf %31, %33 : vector<2x32xf32>
    %37 = arith.addf %35, %36 : vector<2x32xf32>
    %38 = math.tanh %37 : vector<2x32xf32>
    %39 = arith.mulf %34, %38 : vector<2x32xf32>
    %c0_17 = arith.constant 0 : index
    %c0_18 = arith.constant 0 : index
    %40 = vector.load %arg6[%c0_17, %c0_18] : memref<2x256xf32, #tpu.memory_space<vmem>>, vector<2x32xf32>
    tpu.vector_store %arg6[%c0_17, %c0_18], %39 {strides = array<i32>} : memref<2x256xf32, #tpu.memory_space<vmem>>, vector<2x32xf32>,
    %41 = vector.extract_strided_slice %7 {offsets = [0, 1, 0], sizes = [2, 1, 128], strides = [1, 1, 1]} : vector<2x8x128xf32> to vector<2x1x128xf32>
    %42 = vector.shape_cast %41 : vector<2x1x128xf32> to vector<2x128xf32>
    %cst_19 = arith.constant dense<0.000000e+00> : vector<2x128xf32>
    %43 = tpu.matmul %39, %8, %cst_19 {dimension_numbers = #tpu.dot_dimension_numbers<[1], [0], [0], [1], [0, 0, 1, 1], [], []>} : vector<2x32xf32>, vector<32x128xf32>, vector<2x128xf32> -> vector<2x128xf32>
    %44 = arith.addf %42, %43 : vector<2x128xf32>
    %45 = arith.mulf %44, %19 : vector<2x128xf32>
    %46 = math.tanh %45 : vector<2x128xf32>
    %47 = arith.mulf %46, %19 : vector<2x128xf32>
    %48 = arith.addf %47, %22 : vector<2x128xf32>
    %49 = vector.extract_strided_slice %48 {offsets = [0, 0], sizes = [2, 32], strides = [1, 1]} : vector<2x128xf32> to vector<2x32xf32>
    %50 = vector.extract_strided_slice %48 {offsets = [0, 32], sizes = [2, 32], strides = [1, 1]} : vector<2x128xf32> to vector<2x32xf32>
    %51 = vector.extract_strided_slice %48 {offsets = [0, 64], sizes = [2, 32], strides = [1, 1]} : vector<2x128xf32> to vector<2x32xf32>
    %52 = vector.extract_strided_slice %48 {offsets = [0, 96], sizes = [2, 32], strides = [1, 1]} : vector<2x128xf32> to vector<2x32xf32>
    %53 = arith.mulf %50, %37 : vector<2x32xf32>
    %54 = arith.mulf %49, %51 : vector<2x32xf32>
    %55 = arith.addf %53, %54 : vector<2x32xf32>
    %56 = math.tanh %55 : vector<2x32xf32>
    %57 = arith.mulf %52, %56 : vector<2x32xf32>
    %c0_20 = arith.constant 0 : index
    %c32 = arith.constant 32 : index
    %58 = vector.load %arg6[%c0_20, %c32] : memref<2x256xf32, #tpu.memory_space<vmem>>, vector<2x32xf32>
    tpu.vector_store %arg6[%c0_20, %c32], %57 {strides = array<i32>} : memref<2x256xf32, #tpu.memory_space<vmem>>, vector<2x32xf32>,
    %59 = vector.extract_strided_slice %7 {offsets = [0, 2, 0], sizes = [2, 1, 128], strides = [1, 1, 1]} : vector<2x8x128xf32> to vector<2x1x128xf32>
    %60 = vector.shape_cast %59 : vector<2x1x128xf32> to vector<2x128xf32>
    %cst_21 = arith.constant dense<0.000000e+00> : vector<2x128xf32>
    %61 = tpu.matmul %57, %8, %cst_21 {dimension_numbers = #tpu.dot_dimension_numbers<[1], [0], [0], [1], [0, 0, 1, 1], [], []>} : vector<2x32xf32>, vector<32x128xf32>, vector<2x128xf32> -> vector<2x128xf32>
    %62 = arith.addf %60, %61 : vector<2x128xf32>
    %63 = arith.mulf %62, %19 : vector<2x128xf32>
    %64 = math.tanh %63 : vector<2x128xf32>
    %65 = arith.mulf %64, %19 : vector<2x128xf32>
    %66 = arith.addf %65, %22 : vector<2x128xf32>
    %67 = vector.extract_strided_slice %66 {offsets = [0, 0], sizes = [2, 32], strides = [1, 1]} : vector<2x128xf32> to vector<2x32xf32>
    %68 = vector.extract_strided_slice %66 {offsets = [0, 32], sizes = [2, 32], strides = [1, 1]} : vector<2x128xf32> to vector<2x32xf32>
    %69 = vector.extract_strided_slice %66 {offsets = [0, 64], sizes = [2, 32], strides = [1, 1]} : vector<2x128xf32> to vector<2x32xf32>
    %70 = vector.extract_strided_slice %66 {offsets = [0, 96], sizes = [2, 32], strides = [1, 1]} : vector<2x128xf32> to vector<2x32xf32>
    %71 = arith.mulf %68, %55 : vector<2x32xf32>
    %72 = arith.mulf %67, %69 : vector<2x32xf32>
    %73 = arith.addf %71, %72 : vector<2x32xf32>
    %74 = math.tanh %73 : vector<2x32xf32>
    %75 = arith.mulf %70, %74 : vector<2x32xf32>
    %c0_22 = arith.constant 0 : index
    %c64 = arith.constant 64 : index
    %76 = vector.load %arg6[%c0_22, %c64] : memref<2x256xf32, #tpu.memory_space<vmem>>, vector<2x32xf32>
    tpu.vector_store %arg6[%c0_22, %c64], %75 {strides = array<i32>} : memref<2x256xf32, #tpu.memory_space<vmem>>, vector<2x32xf32>,
    %77 = vector.extract_strided_slice %7 {offsets = [0, 3, 0], sizes = [2, 1, 128], strides = [1, 1, 1]} : vector<2x8x128xf32> to vector<2x1x128xf32>
    %78 = vector.shape_cast %77 : vector<2x1x128xf32> to vector<2x128xf32>
    %cst_23 = arith.constant dense<0.000000e+00> : vector<2x128xf32>
    %79 = tpu.matmul %75, %8, %cst_23 {dimension_numbers = #tpu.dot_dimension_numbers<[1], [0], [0], [1], [0, 0, 1, 1], [], []>} : vector<2x32xf32>, vector<32x128xf32>, vector<2x128xf32> -> vector<2x128xf32>
    %80 = arith.addf %78, %79 : vector<2x128xf32>
    %81 = arith.mulf %80, %19 : vector<2x128xf32>
    %82 = math.tanh %81 : vector<2x128xf32>
    %83 = arith.mulf %82, %19 : vector<2x128xf32>
    %84 = arith.addf %83, %22 : vector<2x128xf32>
    %85 = vector.extract_strided_slice %84 {offsets = [0, 0], sizes = [2, 32], strides = [1, 1]} : vector<2x128xf32> to vector<2x32xf32>
    %86 = vector.extract_strided_slice %84 {offsets = [0, 32], sizes = [2, 32], strides = [1, 1]} : vector<2x128xf32> to vector<2x32xf32>
    %87 = vector.extract_strided_slice %84 {offsets = [0, 64], sizes = [2, 32], strides = [1, 1]} : vector<2x128xf32> to vector<2x32xf32>
    %88 = vector.extract_strided_slice %84 {offsets = [0, 96], sizes = [2, 32], strides = [1, 1]} : vector<2x128xf32> to vector<2x32xf32>
    %89 = arith.mulf %86, %73 : vector<2x32xf32>
    %90 = arith.mulf %85, %87 : vector<2x32xf32>
    %91 = arith.addf %89, %90 : vector<2x32xf32>
    %92 = math.tanh %91 : vector<2x32xf32>
    %93 = arith.mulf %88, %92 : vector<2x32xf32>
    %c0_24 = arith.constant 0 : index
    %c96 = arith.constant 96 : index
    %94 = vector.load %arg6[%c0_24, %c96] : memref<2x256xf32, #tpu.memory_space<vmem>>, vector<2x32xf32>
    tpu.vector_store %arg6[%c0_24, %c96], %93 {strides = array<i32>} : memref<2x256xf32, #tpu.memory_space<vmem>>, vector<2x32xf32>,
    %95 = vector.extract_strided_slice %7 {offsets = [0, 4, 0], sizes = [2, 1, 128], strides = [1, 1, 1]} : vector<2x8x128xf32> to vector<2x1x128xf32>
    %96 = vector.shape_cast %95 : vector<2x1x128xf32> to vector<2x128xf32>
    %cst_25 = arith.constant dense<0.000000e+00> : vector<2x128xf32>
    %97 = tpu.matmul %93, %8, %cst_25 {dimension_numbers = #tpu.dot_dimension_numbers<[1], [0], [0], [1], [0, 0, 1, 1], [], []>} : vector<2x32xf32>, vector<32x128xf32>, vector<2x128xf32> -> vector<2x128xf32>
    %98 = arith.addf %96, %97 : vector<2x128xf32>
    %99 = arith.mulf %98, %19 : vector<2x128xf32>
    %100 = math.tanh %99 : vector<2x128xf32>
    %101 = arith.mulf %100, %19 : vector<2x128xf32>
    %102 = arith.addf %101, %22 : vector<2x128xf32>
    %103 = vector.extract_strided_slice %102 {offsets = [0, 0], sizes = [2, 32], strides = [1, 1]} : vector<2x128xf32> to vector<2x32xf32>
    %104 = vector.extract_strided_slice %102 {offsets = [0, 32], sizes = [2, 32], strides = [1, 1]} : vector<2x128xf32> to vector<2x32xf32>
    %105 = vector.extract_strided_slice %102 {offsets = [0, 64], sizes = [2, 32], strides = [1, 1]} : vector<2x128xf32> to vector<2x32xf32>
    %106 = vector.extract_strided_slice %102 {offsets = [0, 96], sizes = [2, 32], strides = [1, 1]} : vector<2x128xf32> to vector<2x32xf32>
    %107 = arith.mulf %104, %91 : vector<2x32xf32>
    %108 = arith.mulf %103, %105 : vector<2x32xf32>
    %109 = arith.addf %107, %108 : vector<2x32xf32>
    %110 = math.tanh %109 : vector<2x32xf32>
    %111 = arith.mulf %106, %110 : vector<2x32xf32>
    %c0_26 = arith.constant 0 : index
    %c128 = arith.constant 128 : index
    %112 = vector.load %arg6[%c0_26, %c128] : memref<2x256xf32, #tpu.memory_space<vmem>>, vector<2x32xf32>
    tpu.vector_store %arg6[%c0_26, %c128], %111 {strides = array<i32>} : memref<2x256xf32, #tpu.memory_space<vmem>>, vector<2x32xf32>,
    %113 = vector.extract_strided_slice %7 {offsets = [0, 5, 0], sizes = [2, 1, 128], strides = [1, 1, 1]} : vector<2x8x128xf32> to vector<2x1x128xf32>
    %114 = vector.shape_cast %113 : vector<2x1x128xf32> to vector<2x128xf32>
    %cst_27 = arith.constant dense<0.000000e+00> : vector<2x128xf32>
    %115 = tpu.matmul %111, %8, %cst_27 {dimension_numbers = #tpu.dot_dimension_numbers<[1], [0], [0], [1], [0, 0, 1, 1], [], []>} : vector<2x32xf32>, vector<32x128xf32>, vector<2x128xf32> -> vector<2x128xf32>
    %116 = arith.addf %114, %115 : vector<2x128xf32>
    %117 = arith.mulf %116, %19 : vector<2x128xf32>
    %118 = math.tanh %117 : vector<2x128xf32>
    %119 = arith.mulf %118, %19 : vector<2x128xf32>
    %120 = arith.addf %119, %22 : vector<2x128xf32>
    %121 = vector.extract_strided_slice %120 {offsets = [0, 0], sizes = [2, 32], strides = [1, 1]} : vector<2x128xf32> to vector<2x32xf32>
    %122 = vector.extract_strided_slice %120 {offsets = [0, 32], sizes = [2, 32], strides = [1, 1]} : vector<2x128xf32> to vector<2x32xf32>
    %123 = vector.extract_strided_slice %120 {offsets = [0, 64], sizes = [2, 32], strides = [1, 1]} : vector<2x128xf32> to vector<2x32xf32>
    %124 = vector.extract_strided_slice %120 {offsets = [0, 96], sizes = [2, 32], strides = [1, 1]} : vector<2x128xf32> to vector<2x32xf32>
    %125 = arith.mulf %122, %109 : vector<2x32xf32>
    %126 = arith.mulf %121, %123 : vector<2x32xf32>
    %127 = arith.addf %125, %126 : vector<2x32xf32>
    %128 = math.tanh %127 : vector<2x32xf32>
    %129 = arith.mulf %124, %128 : vector<2x32xf32>
    %c0_28 = arith.constant 0 : index
    %c160 = arith.constant 160 : index
    %130 = vector.load %arg6[%c0_28, %c160] : memref<2x256xf32, #tpu.memory_space<vmem>>, vector<2x32xf32>
    tpu.vector_store %arg6[%c0_28, %c160], %129 {strides = array<i32>} : memref<2x256xf32, #tpu.memory_space<vmem>>, vector<2x32xf32>,
    %131 = vector.extract_strided_slice %7 {offsets = [0, 6, 0], sizes = [2, 1, 128], strides = [1, 1, 1]} : vector<2x8x128xf32> to vector<2x1x128xf32>
    %132 = vector.shape_cast %131 : vector<2x1x128xf32> to vector<2x128xf32>
    %cst_29 = arith.constant dense<0.000000e+00> : vector<2x128xf32>
    %133 = tpu.matmul %129, %8, %cst_29 {dimension_numbers = #tpu.dot_dimension_numbers<[1], [0], [0], [1], [0, 0, 1, 1], [], []>} : vector<2x32xf32>, vector<32x128xf32>, vector<2x128xf32> -> vector<2x128xf32>
    %134 = arith.addf %132, %133 : vector<2x128xf32>
    %135 = arith.mulf %134, %19 : vector<2x128xf32>
    %136 = math.tanh %135 : vector<2x128xf32>
    %137 = arith.mulf %136, %19 : vector<2x128xf32>
    %138 = arith.addf %137, %22 : vector<2x128xf32>
    %139 = vector.extract_strided_slice %138 {offsets = [0, 0], sizes = [2, 32], strides = [1, 1]} : vector<2x128xf32> to vector<2x32xf32>
    %140 = vector.extract_strided_slice %138 {offsets = [0, 32], sizes = [2, 32], strides = [1, 1]} : vector<2x128xf32> to vector<2x32xf32>
    %141 = vector.extract_strided_slice %138 {offsets = [0, 64], sizes = [2, 32], strides = [1, 1]} : vector<2x128xf32> to vector<2x32xf32>
    %142 = vector.extract_strided_slice %138 {offsets = [0, 96], sizes = [2, 32], strides = [1, 1]} : vector<2x128xf32> to vector<2x32xf32>
    %143 = arith.mulf %140, %127 : vector<2x32xf32>
    %144 = arith.mulf %139, %141 : vector<2x32xf32>
    %145 = arith.addf %143, %144 : vector<2x32xf32>
    %146 = math.tanh %145 : vector<2x32xf32>
    %147 = arith.mulf %142, %146 : vector<2x32xf32>
    %c0_30 = arith.constant 0 : index
    %c192 = arith.constant 192 : index
    %148 = vector.load %arg6[%c0_30, %c192] : memref<2x256xf32, #tpu.memory_space<vmem>>, vector<2x32xf32>
    tpu.vector_store %arg6[%c0_30, %c192], %147 {strides = array<i32>} : memref<2x256xf32, #tpu.memory_space<vmem>>, vector<2x32xf32>,
    %149 = vector.extract_strided_slice %7 {offsets = [0, 7, 0], sizes = [2, 1, 128], strides = [1, 1, 1]} : vector<2x8x128xf32> to vector<2x1x128xf32>
    %150 = vector.shape_cast %149 : vector<2x1x128xf32> to vector<2x128xf32>
    %cst_31 = arith.constant dense<0.000000e+00> : vector<2x128xf32>
    %151 = tpu.matmul %147, %8, %cst_31 {dimension_numbers = #tpu.dot_dimension_numbers<[1], [0], [0], [1], [0, 0, 1, 1], [], []>} : vector<2x32xf32>, vector<32x128xf32>, vector<2x128xf32> -> vector<2x128xf32>
    %152 = arith.addf %150, %151 : vector<2x128xf32>
    %153 = arith.mulf %152, %19 : vector<2x128xf32>
    %154 = math.tanh %153 : vector<2x128xf32>
    %155 = arith.mulf %154, %19 : vector<2x128xf32>
    %156 = arith.addf %155, %22 : vector<2x128xf32>
    %157 = vector.extract_strided_slice %156 {offsets = [0, 0], sizes = [2, 32], strides = [1, 1]} : vector<2x128xf32> to vector<2x32xf32>
    %158 = vector.extract_strided_slice %156 {offsets = [0, 32], sizes = [2, 32], strides = [1, 1]} : vector<2x128xf32> to vector<2x32xf32>
    %159 = vector.extract_strided_slice %156 {offsets = [0, 64], sizes = [2, 32], strides = [1, 1]} : vector<2x128xf32> to vector<2x32xf32>
    %160 = vector.extract_strided_slice %156 {offsets = [0, 96], sizes = [2, 32], strides = [1, 1]} : vector<2x128xf32> to vector<2x32xf32>
    %161 = arith.mulf %158, %145 : vector<2x32xf32>
    %162 = arith.mulf %157, %159 : vector<2x32xf32>
    %163 = arith.addf %161, %162 : vector<2x32xf32>
    %164 = math.tanh %163 : vector<2x32xf32>
    %165 = arith.mulf %160, %164 : vector<2x32xf32>
    %c0_32 = arith.constant 0 : index
    %c224 = arith.constant 224 : index
    %166 = vector.load %arg6[%c0_32, %c224] : memref<2x256xf32, #tpu.memory_space<vmem>>, vector<2x32xf32>
    tpu.vector_store %arg6[%c0_32, %c224], %165 {strides = array<i32>} : memref<2x256xf32, #tpu.memory_space<vmem>>, vector<2x32xf32>,
    %c0_33 = arith.constant 0 : index
    %c0_34 = arith.constant 0 : index
    %167 = vector.load %arg7[%c0_33, %c0_34] : memref<2x32xf32, #tpu.memory_space<vmem>>, vector<2x32xf32>
    tpu.vector_store %arg7[%c0_33, %c0_34], %165 {strides = array<i32>} : memref<2x32xf32, #tpu.memory_space<vmem>>, vector<2x32xf32>,
    %c0_35 = arith.constant 0 : index
    %c0_36 = arith.constant 0 : index
    %168 = vector.load %arg8[%c0_35, %c0_36] : memref<2x32xf32, #tpu.memory_space<vmem>>, vector<2x32xf32>
    tpu.vector_store %arg8[%c0_35, %c0_36], %163 {strides = array<i32>} : memref<2x32xf32, #tpu.memory_space<vmem>>, vector<2x32xf32>,
    return
  }
}

</mosaic_0001>

<llo_original>
// kernel: encoder_forward.1
$region0: #{encoder_forward.1}
  #allocation0 [shape = 'u32[]', space=smem, size = 0x4, offset = 0x4, fixed_abs, tag = 'smem constant byte address 0x4 - core index']
  #allocation1 [shape = 'u32[72,128]{1,0:T(1,128)}', space=vmem, size = 0x9000, scoped, tag = 'internal scratch']
  %s0 = inlined_call_operand.hbm [shape: f32[2,8,16], index: 0, kind: input, shape index: {}]
  %s1 = inlined_call_operand.vmem [shape: f32[2,32], index: 1, kind: input, shape index: {}]
  %s2 = inlined_call_operand.hbm [shape: f32[2,32], index: 2, kind: input, shape index: {}]
  %s3 = inlined_call_operand.hbm [shape: f32[16,128], index: 3, kind: input, shape index: {}]
  %s4 = inlined_call_operand.hbm [shape: f32[32,128], index: 4, kind: input, shape index: {}]
  %s5 = inlined_call_operand.vmem [shape: f32[1,128], index: 5, kind: input, shape index: {}]
  %s6 = inlined_call_operand.vmem [shape: f32[2,256], index: 6, kind: output, shape index: {0}]
  %s7 = inlined_call_operand.hbm [shape: f32[2,32], index: 7, kind: output, shape index: {1}]
  %s8 = inlined_call_operand.hbm [shape: f32[2,32], index: 8, kind: output, shape index: {2}]
  %9 = xla_tuple %s6, %s7, %s8
  %s10 = sld [smem:[#allocation0]]
  $region66: #{encoder_forward.1} parent=0
    _
  %s12 = ssub.s32 1, %s10
  %s13 = scalar_select 0, %s12, %s10
  $region1: #{encoder_forward.1} parent=0
    #allocation2 [shape = 'u8[8192]{0}', space=vmem, size = 0x2000, scoped, tag = 'input window, operand 0, single buffered']
    #allocation3 [shape = 's32[1]{0}', space=sflag, size = 0x4, scoped, tag = 'scoped memory for encoder_forward.1']
    #allocation4 [shape = 's32[1]{0}', space=sflag, size = 0x4, scoped, tag = 'scoped memory for encoder_forward.1']
    #allocation5 [shape = 'u8[1024]{0}', space=vmem, size = 0x400, scoped, tag = 'input window, operand 2, single buffered']
    #allocation6 [shape = 's32[1]{0}', space=sflag, size = 0x4, scoped, tag = 'scoped memory for encoder_forward.1']
    #allocation7 [shape = 'u8[8192]{0}', space=vmem, size = 0x2000, scoped, tag = 'input window, operand 3, single buffered']
    #allocation8 [shape = 'u8[16384]{0}', space=vmem, size = 0x4000, scoped, tag = 'input window, operand 4, single buffered']
    #allocation9 [shape = 's32[1]{0}', space=sflag, size = 0x4, scoped, tag = 'scoped memory for encoder_forward.1']
    #allocation10 [shape = 'u8[1024]{0}', space=vmem, size = 0x400, scoped, tag = 'output window, operand 1, single buffered']
    #allocation11 [shape = 'u8[1024]{0}', space=vmem, size = 0x400, scoped, tag = 'output window, operand 2, single buffered']
    #allocation12 [shape = 's32[1]{0}', space=sflag, size = 0x4, scoped, tag = 'scoped memory for encoder_forward.1']
    %14 = vsyncpa [#allocation3], 0
    %15 = vsyncpa [#allocation6], 0
    %16 = vsyncpa [#allocation9], 0
    %17 = vsyncpa [#allocation4], 0
    %18 = vsyncpa [#allocation12], 0
    // Predicated region
    $region2: #{encoder_forward.1} parent=1 // pred_check
      _
    $region3: #{encoder_forward.1} parent=1 // pred_check_branch
      %20 = sbr.rel (0) target = $region5
    $region4: #{encoder_forward.1} parent=1 // pred_region
      %22 = vsyncadd [#allocation3], 0
      %s23 = sshll.u32 %s0, 4
      %s24 = int_to_ptr.hbm [resolvable:$true] %s23
      %s25 = sshll.u32 [#allocation2], 4
      %s26 = int_to_ptr.vmem [resolvable:$true] %s25
      %31 = dma.hbm_to_vmem [thread:$0]  %s24, 256, %s26, [#allocation3], 128, 128, 8
    $region5: #{encoder_forward.1} parent=1 // pred_fallthru
      _
    // Predicated region
    $region6: #{encoder_forward.1} parent=1 // pred_check
      _
    $region7: #{encoder_forward.1} parent=1 // pred_check_branch
      %33 = sbr.rel (0) target = $region9
    $region8: #{encoder_forward.1} parent=1 // pred_region
      _
    $region9: #{encoder_forward.1} parent=1 // pred_fallthru
      _
    // Predicated region
    $region10: #{encoder_forward.1} parent=1 // pred_check
      _
    $region11: #{encoder_forward.1} parent=1 // pred_check_branch
      %35 = sbr.rel (0) target = $region13
    $region12: #{encoder_forward.1} parent=1 // pred_region
      %37 = vsyncadd [#allocation6], 0
      %s39 = sshll.u32 %s2, 4
      %s40 = int_to_ptr.hbm [resolvable:$true] %s39
      %s41 = sshll.u32 [#allocation5], 4
      %s42 = int_to_ptr.vmem [resolvable:$true] %s41
      %44 = dma.hbm_to_vmem [thread:$0]  %s40, 32, %s42, [#allocation6]
    $region13: #{encoder_forward.1} parent=1 // pred_fallthru
      _
    // Predicated region
    $region14: #{encoder_forward.1} parent=1 // pred_check
      _
    $region15: #{encoder_forward.1} parent=1 // pred_check_branch
      %46 = sbr.rel (0) target = $region17
    $region16: #{encoder_forward.1} parent=1 // pred_region
      %48 = vsyncadd [#allocation6], 0
      %s49 = sshll.u32 %s3, 4
      %s50 = int_to_ptr.hbm [resolvable:$true] %s49
      %s51 = sshll.u32 [#allocation7], 4
      %s52 = int_to_ptr.vmem [resolvable:$true] %s51
      %57 = dma.hbm_to_vmem [thread:$0]  %s50, 256, %s52, [#allocation6], 128, 128, 8
    $region17: #{encoder_forward.1} parent=1 // pred_fallthru
      _
    // Predicated region
    $region18: #{encoder_forward.1} parent=1 // pred_check
      _
    $region19: #{encoder_forward.1} parent=1 // pred_check_branch
      %59 = sbr.rel (0) target = $region21
    $region20: #{encoder_forward.1} parent=1 // pred_region
      %61 = vsyncadd [#allocation9], 0
      %s62 = sshll.u32 %s4, 4
      %s63 = int_to_ptr.hbm [resolvable:$true] %s62
      %s64 = sshll.u32 [#allocation8], 4
      %s65 = int_to_ptr.vmem [resolvable:$true] %s64
      %70 = dma.hbm_to_vmem [thread:$0]  %s63, 512, %s65, [#allocation9], 128, 128, 8
    $region21: #{encoder_forward.1} parent=1 // pred_fallthru
      _
    // Predicated region
    $region22: #{encoder_forward.1} parent=1 // pred_check
      _
    $region23: #{encoder_forward.1} parent=1 // pred_check_branch
      %72 = sbr.rel (0) target = $region25
    $region24: #{encoder_forward.1} parent=1 // pred_region
      _
    $region25: #{encoder_forward.1} parent=1 // pred_fallthru
      _
    // Predicated region
    $region26: #{encoder_forward.1} parent=1 // pred_check
      _
    $region27: #{encoder_forward.1} parent=1 // pred_check_branch
      %74 = sbr.rel (0) target = $region29
    $region28: #{encoder_forward.1} parent=1 // pred_region
      %76 = dma.done [#allocation3], 256
    $region29: #{encoder_forward.1} parent=1 // pred_fallthru
      _
    // Predicated region
    $region30: #{encoder_forward.1} parent=1 // pred_check
      _
    $region31: #{encoder_forward.1} parent=1 // pred_check_branch
      %78 = sbr.rel (0) target = $region33
    $region32: #{encoder_forward.1} parent=1 // pred_region
      %80 = dma.done [#allocation6], 32
    $region33: #{encoder_forward.1} parent=1 // pred_fallthru
      _
    // Predicated region
    $region34: #{encoder_forward.1} parent=1 // pred_check
      _
    $region35: #{encoder_forward.1} parent=1 // pred_check_branch
      %82 = sbr.rel (0) target = $region37
    $region36: #{encoder_forward.1} parent=1 // pred_region
      %84 = dma.done [#allocation6], 256
    $region37: #{encoder_forward.1} parent=1 // pred_fallthru
      _
    // Predicated region
    $region38: #{encoder_forward.1} parent=1 // pred_check
      _
    $region39: #{encoder_forward.1} parent=1 // pred_check_branch
      %86 = sbr.rel (0) target = $region41
    $region40: #{encoder_forward.1} parent=1 // pred_region
      %88 = dma.done [#allocation9], 512
    $region41: #{encoder_forward.1} parent=1 // pred_fallthru
      _
    %v89 = vld [vmem:[#allocation2] sm:$0xff]
    %v90 = vld [vmem:[#allocation2 + $0x8] sm:$0xff]
    %v91 = vld [vmem:[#allocation7] sm:$0xff]
    %v92 = vld [vmem:[#allocation7 + $0x8] sm:$0xff]
    %v93 = vld [vmem:[%s5] sm:$0x1]
    %v95 = vperm.slane %v93, 0
    %vm97 = vcmask 130048
    %v99 = vsel %vm97, %v89, 0
    %v102 = vsel %vm97, %v90, 0
    %104 = vmatpush.msra.mxu0 0.0
    %105 = vmatpush.msra.mxu0 0.0
    %106 = vmatpush.msra.mxu0 0.0
    %107 = vmatpush.msra.mxu0 0.0
    %108 = vmatpush.msra.mxu0 0.0
    %109 = vmatpush.msra.mxu0 0.0
    %110 = vmatpush.msra.mxu0 0.0
    %111 = vmatpush.msra.mxu0 0.0
    %112 = vmatpush.msra.mxu0 0.0
    %113 = vmatpush.msra.mxu0 0.0
    %114 = vmatpush.msra.mxu0 0.0
    %115 = vmatpush.msra.mxu0 0.0
    %116 = vmatpush.msra.mxu0 0.0
    %117 = vmatpush.msra.mxu0 0.0
    %118 = vmatpush.msra.mxu0 %v92
    %119 = vmatpush.msra.mxu0 %v91
    %120 = vmatmul.f32.gmra.mxu0 %v99
    %v121 = vpop.f32.mrf.mxu0
    %v122 = vadd.f32 %v95, %v121
    %123 = vmatmul.f32.gmra.mxu0 %v102
    %v124 = vpop.f32.mrf.mxu0
    %v125 = vadd.f32 %v95, %v124
    %126 = vdwg.mxu0
    %v127 = vld [vmem:[#allocation8] sm:$0xff]
    %v128 = vld [vmem:[#allocation8 + $0x8] sm:$0xff]
    %v129 = vld [vmem:[#allocation8 + $0x10] sm:$0xff]
    %v130 = vld [vmem:[#allocation8 + $0x18] sm:$0xff]
    %v131 = vld [vmem:[%s1] sm:$0x3]
    %v132 = vld [vmem:[#allocation5] sm:$0x3]
    %v133 = vlaneseq
    %v134 = vand.u32 %v133, 127
    %vm135 = vcmp.ge.s32.totalorder %v134, 64
    %vm136 = vcmp.lt.s32.totalorder %v134, 96
    %vm137 = vmand %vm135, %vm136
    %v138 = vsel %vm137, 1.0, 0.5
    %v139 = vsel %vm137, 0.0, 0.5
    %vm140 = vcmask 261120
    %v142 = vsel %vm140, %v131, 0
    %144 = vmatpush.msra.mxu0 0.0
    %145 = vmatpush.msra.mxu0 0.0
    %146 = vmatpush.msra.mxu0 0.0
    %147 = vmatpush.msra.mxu0 0.0
    %148 = vmatpush.msra.mxu0 0.0
    %149 = vmatpush.msra.mxu0 0.0
    %150 = vmatpush.msra.mxu0 0.0
    %151 = vmatpush.msra.mxu0 0.0
    %152 = vmatpush.msra.mxu0 0.0
    %153 = vmatpush.msra.mxu0 0.0
    %154 = vmatpush.msra.mxu0 0.0
    %155 = vmatpush.msra.mxu0 0.0
    %156 = vmatpush.msra.mxu0 %v130
    %157 = vmatpush.msra.mxu0 %v129
    %158 = vmatpush.msra.mxu0 %v128
    %159 = vmatpush.msra.mxu0 %v127
    %160 = vmatmul.f32.gmra.mxu0 %v142
    %v161 = vpop.f32.mrf.mxu0
    %v162 = vadd.f32 0.0, %v161
    %163 = vdwg.mxu0
    %v165 = vrot.slane %v162, 1
    %v168 = vadd.f32 %v122, %v162
    %v169 = vadd.f32 %v125, %v165
    %v170 = vmul.f32 %v168, %v138
    %v171 = vmul.f32 %v169, %v138
    %v172 = vtanh.pop %v170
    %v173 = vtanh.pop %v171
    %v174 = vmul.f32 %v172, %v138
    %v175 = vmul.f32 %v173, %v138
    %v176 = vadd.f32 %v174, %v139
    %v177 = vadd.f32 %v175, %v139
    %v179 = vrot.slane %v132, 1
    %180 = vrot.lane.b32.xlu0 %v132, 32
    %v181 = vpop.permute.xlu0 %180
    %182 = vrot.lane.b32.xlu0 %v179, 32
    %v183 = vpop.permute.xlu0 %182
    %v186 = vmul.f32 %v176, %v181
    %v187 = vmul.f32 %v177, %v183
    %190 = vrot.lane.b32.xlu0 %v176, 64
    %v191 = vpop.permute.xlu0 %190
    %192 = vrot.lane.b32.xlu0 %v177, 64
    %v193 = vpop.permute.xlu0 %192
    %v196 = vmul.f32 %v176, %v191
    %v197 = vmul.f32 %v177, %v193
    %200 = vrot.lane.b32.xlu0 %v196, 32
    %v201 = vpop.permute.xlu0 %200
    %202 = vrot.lane.b32.xlu0 %v197, 32
    %v203 = vpop.permute.xlu0 %202
    %v206 = vadd.f32 %v186, %v201
    %v207 = vadd.f32 %v187, %v203
    %v208 = vtanh.pop %v206
    %v209 = vtanh.pop %v207
    %212 = vrot.lane.b32.xlu0 %v208, 64
    %v213 = vpop.permute.xlu0 %212
    %214 = vrot.lane.b32.xlu0 %v209, 64
    %v215 = vpop.permute.xlu0 %214
    %v218 = vmul.f32 %v176, %v213
    %v219 = vmul.f32 %v177, %v215
    %vm222 = vcmask 1044484
    %v223 = vsel %vm222, %v218, %v218
    %vm224 = vcmask 1046534
    %v225 = vsel %vm224, %v218, %v223
    %v226 = vrot.slane %v219, 7
    %vm227 = vcmask 1041409
    %v228 = vsel %vm227, %v226, %v225
    %vm229 = vcmask 1043459
    %v230 = vsel %vm229, %v226, %v228
    %vm231 = vcmask 1045509
    %v232 = vsel %vm231, %v226, %v230
    %vm233 = vcmask 1047559
    %v234 = vsel %vm233, %v226, %v232
    %235 = vrot.lane.b32.xlu0 %v234, 32
    %v236 = vpop.permute.xlu0 %235
    %vm238 = vcmask 254976
    %239 = vst.msk [vmem:[%s6] sm:$0x3] %vm238, %v236
    %v240 = vsel %vm227, %v226, %v218
    %241 = vrot.lane.b32.xlu0 %v240, 32
    %v242 = vpop.permute.xlu0 %241
    %v243 = vsel %vm140, %v242, 0
    %245 = vmatpush.msra.mxu0 0.0
    %246 = vmatpush.msra.mxu0 0.0
    %247 = vmatpush.msra.mxu0 0.0
    %248 = vmatpush.msra.mxu0 0.0
    %249 = vmatpush.msra.mxu0 0.0
    %250 = vmatpush.msra.mxu0 0.0
    %251 = vmatpush.msra.mxu0 0.0
    %252 = vmatpush.msra.mxu0 0.0
    %253 = vmatpush.msra.mxu0 0.0
    %254 = vmatpush.msra.mxu0 0.0
    %255 = vmatpush.msra.mxu0 0.0
    %256 = vmatpush.msra.mxu0 0.0
    %257 = vmatpush.msra.mxu0 %v130
    %258 = vmatpush.msra.mxu0 %v129
    %259 = vmatpush.msra.mxu0 %v128
    %260 = vmatpush.msra.mxu0 %v127
    %261 = vmatmul.f32.gmra.mxu0 %v243
    %v262 = vpop.f32.mrf.mxu0
    %v263 = vadd.f32 0.0, %v262
    %264 = vdwg.mxu0
    %v266 = vrot.slane %v263, 7
    %v269 = vadd.f32 %v122, %v266
    %v270 = vadd.f32 %v125, %v263
    %v271 = vmul.f32 %v269, %v138
    %v272 = vmul.f32 %v270, %v138
    %v273 = vtanh.pop %v271
    %v274 = vtanh.pop %v272
    %v275 = vmul.f32 %v273, %v138
    %v276 = vmul.f32 %v274, %v138
    %v277 = vadd.f32 %v275, %v139
    %v278 = vadd.f32 %v276, %v139
    %v281 = vrot.slane %v206, 7
    %v282 = vrot.slane %v207, 7
    %v285 = vmul.f32 %v277, %v281
    %v286 = vmul.f32 %v278, %v282
    %289 = vrot.lane.b32.xlu0 %v277, 64
    %v290 = vpop.permute.xlu0 %289
    %291 = vrot.lane.b32.xlu0 %v278, 64
    %v292 = vpop.permute.xlu0 %291
    %v295 = vmul.f32 %v277, %v290
    %v296 = vmul.f32 %v278, %v292
    %299 = vrot.lane.b32.xlu0 %v295, 32
    %v300 = vpop.permute.xlu0 %299
    %301 = vrot.lane.b32.xlu0 %v296, 32
    %v302 = vpop.permute.xlu0 %301
    %v305 = vadd.f32 %v285, %v300
    %v306 = vadd.f32 %v286, %v302
    %v307 = vtanh.pop %v305
    %v308 = vtanh.pop %v306
    %311 = vrot.lane.b32.xlu0 %v307, 64
    %v312 = vpop.permute.xlu0 %311
    %313 = vrot.lane.b32.xlu0 %v308, 64
    %v314 = vpop.permute.xlu0 %313
    %v317 = vmul.f32 %v277, %v312
    %v318 = vmul.f32 %v278, %v314
    %v321 = vrot.slane %v317, 1
    %v322 = vsel %vm222, %v321, %v321
    %v323 = vsel %vm224, %v321, %v322
    %v324 = vsel %vm227, %v318, %v323
    %v325 = vsel %vm229, %v318, %v324
    %v326 = vsel %vm231, %v318, %v325
    %v327 = vsel %vm233, %v318, %v326
    %328 = vrot.lane.b32.xlu0 %v327, 64
    %v329 = vpop.permute.xlu0 %328
    %vm331 = vcmask 517376
    %332 = vst.msk [vmem:[%s6] sm:$0x3] %vm331, %v329
    %v333 = vsel %vm227, %v318, %v321
    %334 = vrot.lane.b32.xlu0 %v333, 32
    %v335 = vpop.permute.xlu0 %334
    %v336 = vsel %vm140, %v335, 0
    %338 = vmatpush.msra.mxu0 0.0
    %339 = vmatpush.msra.mxu0 0.0
    %340 = vmatpush.msra.mxu0 0.0
    %341 = vmatpush.msra.mxu0 0.0
    %342 = vmatpush.msra.mxu0 0.0
    %343 = vmatpush.msra.mxu0 0.0
    %344 = vmatpush.msra.mxu0 0.0
    %345 = vmatpush.msra.mxu0 0.0
    %346 = vmatpush.msra.mxu0 0.0
    %347 = vmatpush.msra.mxu0 0.0
    %348 = vmatpush.msra.mxu0 0.0
    %349 = vmatpush.msra.mxu0 0.0
    %350 = vmatpush.msra.mxu0 %v130
    %351 = vmatpush.msra.mxu0 %v129
    %352 = vmatpush.msra.mxu0 %v128
    %353 = vmatpush.msra.mxu0 %v127
    %354 = vmatmul.f32.gmra.mxu0 %v336
    %v355 = vpop.f32.mrf.mxu0
    %v356 = vadd.f32 0.0, %v355
    %357 = vdwg.mxu0
    %v359 = vrot.slane %v356, 6
    %v360 = vrot.slane %v356, 7
    %v363 = vadd.f32 %v122, %v359
    %v364 = vadd.f32 %v125, %v360
    %v365 = vmul.f32 %v363, %v138
    %v366 = vmul.f32 %v364, %v138
    %v367 = vtanh.pop %v365
    %v368 = vtanh.pop %v366
    %v369 = vmul.f32 %v367, %v138
    %v370 = vmul.f32 %v368, %v138
    %v371 = vadd.f32 %v369, %v139
    %v372 = vadd.f32 %v370, %v139
    %v375 = vrot.slane %v305, 7
    %v376 = vrot.slane %v306, 7
    %v379 = vmul.f32 %v371, %v375
    %v380 = vmul.f32 %v372, %v376
    %383 = vrot.lane.b32.xlu0 %v371, 64
    %v384 = vpop.permute.xlu0 %383
    %385 = vrot.lane.b32.xlu0 %v372, 64
    %v386 = vpop.permute.xlu0 %385
    %v389 = vmul.f32 %v371, %v384
    %v390 = vmul.f32 %v372, %v386
    %393 = vrot.lane.b32.xlu0 %v389, 32
    %v394 = vpop.permute.xlu0 %393
    %395 = vrot.lane.b32.xlu0 %v390, 32
    %v396 = vpop.permute.xlu0 %395
    %v399 = vadd.f32 %v379, %v394
    %v400 = vadd.f32 %v380, %v396
    %v401 = vtanh.pop %v399
    %v402 = vtanh.pop %v400
    %405 = vrot.lane.b32.xlu0 %v401, 64
    %v406 = vpop.permute.xlu0 %405
    %407 = vrot.lane.b32.xlu0 %v402, 64
    %v408 = vpop.permute.xlu0 %407
    %v411 = vmul.f32 %v371, %v406
    %v412 = vmul.f32 %v372, %v408
    %415 = vst.sshfl [vmem:[#allocation1] sm:$0xff pattern:$0x73625140] %v411
    %s416 = scalar_lea.vmem [#allocation1], 1
    %v417 = vld [vmem:[%s416] ss:$4 sm:$0xff]
    %418 = vst.sshfl [vmem:[#allocation1 + $0x20] sm:$0xff pattern:$0x73625140] %v412
    %s419 = scalar_lea.vmem [#allocation1], 33
    %v420 = vld [vmem:[%s419] ss:$4 sm:$0xff]
    %v421 = vsel %vm222, %v417, %v417
    %v422 = vsel %vm224, %v417, %v421
    %v423 = vrot.slane %v420, 7
    %v424 = vsel %vm227, %v423, %v422
    %v425 = vsel %vm229, %v423, %v424
    %v426 = vsel %vm231, %v423, %v425
    %v427 = vsel %vm233, %v423, %v426
    %428 = vrot.lane.b32.xlu0 %v427, 96
    %v429 = vpop.permute.xlu0 %428
    %vm431 = vcmask 779776
    %432 = vst.msk [vmem:[%s6] sm:$0x3] %vm431, %v429
    %v433 = vrot.slane %v411, 2
    %v434 = vrot.slane %v412, 1
    %v435 = vsel %vm227, %v434, %v433
    %436 = vrot.lane.b32.xlu0 %v435, 32
    %v437 = vpop.permute.xlu0 %436
    %v438 = vsel %vm140, %v437, 0
    %440 = vmatpush.msra.mxu0 0.0
    %441 = vmatpush.msra.mxu0 0.0
    %442 = vmatpush.msra.mxu0 0.0
    %443 = vmatpush.msra.mxu0 0.0
    %444 = vmatpush.msra.mxu0 0.0
    %445 = vmatpush.msra.mxu0 0.0
    %446 = vmatpush.msra.mxu0 0.0
    %447 = vmatpush.msra.mxu0 0.0
    %448 = vmatpush.msra.mxu0 0.0
    %449 = vmatpush.msra.mxu0 0.0
    %450 = vmatpush.msra.mxu0 0.0
    %451 = vmatpush.msra.mxu0 0.0
    %452 = vmatpush.msra.mxu0 %v130
    %453 = vmatpush.msra.mxu0 %v129
    %454 = vmatpush.msra.mxu0 %v128
    %455 = vmatpush.msra.mxu0 %v127
    %456 = vmatmul.f32.gmra.mxu0 %v438
    %v457 = vpop.f32.mrf.mxu0
    %v458 = vadd.f32 0.0, %v457
    %459 = vdwg.mxu0
    %v461 = vrot.slane %v458, 5
    %v462 = vrot.slane %v458, 6
    %v465 = vadd.f32 %v122, %v461
    %v466 = vadd.f32 %v125, %v462
    %v467 = vmul.f32 %v465, %v138
    %v468 = vmul.f32 %v466, %v138
    %v469 = vtanh.pop %v467
    %v470 = vtanh.pop %v468
    %v471 = vmul.f32 %v469, %v138
    %v472 = vmul.f32 %v470, %v138
    %v473 = vadd.f32 %v471, %v139
    %v474 = vadd.f32 %v472, %v139
    %v477 = vrot.slane %v399, 7
    %v478 = vrot.slane %v400, 7
    %v481 = vmul.f32 %v473, %v477
    %v482 = vmul.f32 %v474, %v478
    %485 = vrot.lane.b32.xlu0 %v473, 64
    %v486 = vpop.permute.xlu0 %485
    %487 = vrot.lane.b32.xlu0 %v474, 64
    %v488 = vpop.permute.xlu0 %487
    %v491 = vmul.f32 %v473, %v486
    %v492 = vmul.f32 %v474, %v488
    %495 = vrot.lane.b32.xlu0 %v491, 32
    %v496 = vpop.permute.xlu0 %495
    %497 = vrot.lane.b32.xlu0 %v492, 32
    %v498 = vpop.permute.xlu0 %497
    %v501 = vadd.f32 %v481, %v496
    %v502 = vadd.f32 %v482, %v498
    %v503 = vtanh.pop %v501
    %v504 = vtanh.pop %v502
    %507 = vrot.lane.b32.xlu0 %v503, 64
    %v508 = vpop.permute.xlu0 %507
    %509 = vrot.lane.b32.xlu0 %v504, 64
    %v510 = vpop.permute.xlu0 %509
    %v513 = vmul.f32 %v473, %v508
    %v514 = vmul.f32 %v474, %v510
    %517 = vst.sshfl [vmem:[#allocation1] sm:$0xff pattern:$0x73625140] %v513
    %s518 = scalar_lea.vmem [#allocation1], 1
    %v519 = vld [vmem:[%s518] ss:$4 sm:$0xff]
    %520 = vst.sshfl [vmem:[#allocation1 + $0x20] sm:$0xff pattern:$0x73625140] %v514
    %s521 = scalar_lea.vmem [#allocation1], 33
    %v522 = vld [vmem:[%s521] ss:$4 sm:$0xff]
    %v523 = vrot.slane %v519, 1
    %v524 = vsel %vm222, %v523, %v523
    %v525 = vsel %vm224, %v523, %v524
    %v526 = vsel %vm227, %v522, %v525
    %v527 = vsel %vm229, %v522, %v526
    %v528 = vsel %vm231, %v522, %v527
    %v529 = vsel %vm233, %v522, %v528
    %vm531 = vcmask 1042176
    %532 = vst.msk [vmem:[%s6] sm:$0x3] %vm531, %v529
    %v533 = vrot.slane %v513, 3
    %v534 = vrot.slane %v514, 2
    %v535 = vsel %vm227, %v534, %v533
    %536 = vrot.lane.b32.xlu0 %v535, 32
    %v537 = vpop.permute.xlu0 %536
    %v538 = vsel %vm140, %v537, 0
    %540 = vmatpush.msra.mxu0 0.0
    %541 = vmatpush.msra.mxu0 0.0
    %542 = vmatpush.msra.mxu0 0.0
    %543 = vmatpush.msra.mxu0 0.0
    %544 = vmatpush.msra.mxu0 0.0
    %545 = vmatpush.msra.mxu0 0.0
    %546 = vmatpush.msra.mxu0 0.0
    %547 = vmatpush.msra.mxu0 0.0
    %548 = vmatpush.msra.mxu0 0.0
    %549 = vmatpush.msra.mxu0 0.0
    %550 = vmatpush.msra.mxu0 0.0
    %551 = vmatpush.msra.mxu0 0.0
    %552 = vmatpush.msra.mxu0 %v130
    %553 = vmatpush.msra.mxu0 %v129
    %554 = vmatpush.msra.mxu0 %v128
    %555 = vmatpush.msra.mxu0 %v127
    %556 = vmatmul.f32.gmra.mxu0 %v538
    %v557 = vpop.f32.mrf.mxu0
    %v558 = vadd.f32 0.0, %v557
    %559 = vdwg.mxu0
    %v561 = vrot.slane %v558, 4
    %v562 = vrot.slane %v558, 5
    %v565 = vadd.f32 %v122, %v561
    %v566 = vadd.f32 %v125, %v562
    %v567 = vmul.f32 %v565, %v138
    %v568 = vmul.f32 %v566, %v138
    %v569 = vtanh.pop %v567
    %v570 = vtanh.pop %v568
    %v571 = vmul.f32 %v569, %v138
    %v572 = vmul.f32 %v570, %v138
    %v573 = vadd.f32 %v571, %v139
    %v574 = vadd.f32 %v572, %v139
    %v577 = vrot.slane %v501, 7
    %v578 = vrot.slane %v502, 7
    %v581 = vmul.f32 %v573, %v577
    %v582 = vmul.f32 %v574, %v578
    %585 = vrot.lane.b32.xlu0 %v573, 64
    %v586 = vpop.permute.xlu0 %585
    %587 = vrot.lane.b32.xlu0 %v574, 64
    %v588 = vpop.permute.xlu0 %587
    %v591 = vmul.f32 %v573, %v586
    %v592 = vmul.f32 %v574, %v588
    %595 = vrot.lane.b32.xlu0 %v591, 32
    %v596 = vpop.permute.xlu0 %595
    %597 = vrot.lane.b32.xlu0 %v592, 32
    %v598 = vpop.permute.xlu0 %597
    %v601 = vadd.f32 %v581, %v596
    %v602 = vadd.f32 %v582, %v598
    %v603 = vtanh.pop %v601
    %v604 = vtanh.pop %v602
    %607 = vrot.lane.b32.xlu0 %v603, 64
    %v608 = vpop.permute.xlu0 %607
    %609 = vrot.lane.b32.xlu0 %v604, 64
    %v610 = vpop.permute.xlu0 %609
    %v613 = vmul.f32 %v573, %v608
    %v614 = vmul.f32 %v574, %v610
    %617 = vst.sshfl [vmem:[#allocation1] sm:$0xff pattern:$0x73625140] %v613
    %s618 = scalar_lea.vmem [#allocation1], 2
    %v619 = vld [vmem:[%s618] ss:$4 sm:$0xff]
    %620 = vst.sshfl [vmem:[#allocation1 + $0x20] sm:$0xff pattern:$0x73625140] %v614
    %s621 = scalar_lea.vmem [#allocation1], 34
    %v622 = vld [vmem:[%s621] ss:$4 sm:$0xff]
    %v623 = vsel %vm222, %v619, %v619
    %v624 = vsel %vm224, %v619, %v623
    %v625 = vrot.slane %v622, 7
    %v626 = vsel %vm227, %v625, %v624
    %v627 = vsel %vm229, %v625, %v626
    %v628 = vsel %vm231, %v625, %v627
    %v629 = vsel %vm233, %v625, %v628
    %630 = vrot.lane.b32.xlu0 %v629, 32
    %v631 = vpop.permute.xlu0 %630
    %633 = vst.msk [vmem:[%s6 + $0x2] sm:$0x3] %vm238, %v631
    %v634 = vrot.slane %v613, 4
    %v635 = vrot.slane %v614, 3
    %v636 = vsel %vm227, %v635, %v634
    %637 = vrot.lane.b32.xlu0 %v636, 32
    %v638 = vpop.permute.xlu0 %637
    %v639 = vsel %vm140, %v638, 0
    %641 = vmatpush.msra.mxu0 0.0
    %642 = vmatpush.msra.mxu0 0.0
    %643 = vmatpush.msra.mxu0 0.0
    %644 = vmatpush.msra.mxu0 0.0
    %645 = vmatpush.msra.mxu0 0.0
    %646 = vmatpush.msra.mxu0 0.0
    %647 = vmatpush.msra.mxu0 0.0
    %648 = vmatpush.msra.mxu0 0.0
    %649 = vmatpush.msra.mxu0 0.0
    %650 = vmatpush.msra.mxu0 0.0
    %651 = vmatpush.msra.mxu0 0.0
    %652 = vmatpush.msra.mxu0 0.0
    %653 = vmatpush.msra.mxu0 %v130
    %654 = vmatpush.msra.mxu0 %v129
    %655 = vmatpush.msra.mxu0 %v128
    %656 = vmatpush.msra.mxu0 %v127
    %657 = vmatmul.f32.gmra.mxu0 %v639
    %v658 = vpop.f32.mrf.mxu0
    %v659 = vadd.f32 0.0, %v658
    %660 = vdwg.mxu0
    %v662 = vrot.slane %v659, 3
    %v663 = vrot.slane %v659, 4
    %v666 = vadd.f32 %v122, %v662
    %v667 = vadd.f32 %v125, %v663
    %v668 = vmul.f32 %v666, %v138
    %v669 = vmul.f32 %v667, %v138
    %v670 = vtanh.pop %v668
    %v671 = vtanh.pop %v669
    %v672 = vmul.f32 %v670, %v138
    %v673 = vmul.f32 %v671, %v138
    %v674 = vadd.f32 %v672, %v139
    %v675 = vadd.f32 %v673, %v139
    %v678 = vrot.slane %v601, 7
    %v679 = vrot.slane %v602, 7
    %v682 = vmul.f32 %v674, %v678
    %v683 = vmul.f32 %v675, %v679
    %686 = vrot.lane.b32.xlu0 %v674, 64
    %v687 = vpop.permute.xlu0 %686
    %688 = vrot.lane.b32.xlu0 %v675, 64
    %v689 = vpop.permute.xlu0 %688
    %v692 = vmul.f32 %v674, %v687
    %v693 = vmul.f32 %v675, %v689
    %696 = vrot.lane.b32.xlu0 %v692, 32
    %v697 = vpop.permute.xlu0 %696
    %698 = vrot.lane.b32.xlu0 %v693, 32
    %v699 = vpop.permute.xlu0 %698
    %v702 = vadd.f32 %v682, %v697
    %v703 = vadd.f32 %v683, %v699
    %v704 = vtanh.pop %v702
    %v705 = vtanh.pop %v703
    %708 = vrot.lane.b32.xlu0 %v704, 64
    %v709 = vpop.permute.xlu0 %708
    %710 = vrot.lane.b32.xlu0 %v705, 64
    %v711 = vpop.permute.xlu0 %710
    %v714 = vmul.f32 %v674, %v709
    %v715 = vmul.f32 %v675, %v711
    %718 = vst.sshfl [vmem:[#allocation1] sm:$0xff pattern:$0x73625140] %v714
    %s719 = scalar_lea.vmem [#allocation1], 2
    %v720 = vld [vmem:[%s719] ss:$4 sm:$0xff]
    %721 = vst.sshfl [vmem:[#allocation1 + $0x20] sm:$0xff pattern:$0x73625140] %v715
    %s722 = scalar_lea.vmem [#allocation1], 34
    %v723 = vld [vmem:[%s722] ss:$4 sm:$0xff]
    %v724 = vrot.slane %v720, 1
    %v725 = vsel %vm222, %v724, %v724
    %v726 = vsel %vm224, %v724, %v725
    %v727 = vsel %vm227, %v723, %v726
    %v728 = vsel %vm229, %v723, %v727
    %v729 = vsel %vm231, %v723, %v728
    %v730 = vsel %vm233, %v723, %v729
    %731 = vrot.lane.b32.xlu0 %v730, 64
    %v732 = vpop.permute.xlu0 %731
    %734 = vst.msk [vmem:[%s6 + $0x2] sm:$0x3] %vm331, %v732
    %v735 = vrot.slane %v714, 5
    %v736 = vrot.slane %v715, 4
    %v737 = vsel %vm227, %v736, %v735
    %738 = vrot.lane.b32.xlu0 %v737, 32
    %v739 = vpop.permute.xlu0 %738
    %v740 = vsel %vm140, %v739, 0
    %742 = vmatpush.msra.mxu0 0.0
    %743 = vmatpush.msra.mxu0 0.0
    %744 = vmatpush.msra.mxu0 0.0
    %745 = vmatpush.msra.mxu0 0.0
    %746 = vmatpush.msra.mxu0 0.0
    %747 = vmatpush.msra.mxu0 0.0
    %748 = vmatpush.msra.mxu0 0.0
    %749 = vmatpush.msra.mxu0 0.0
    %750 = vmatpush.msra.mxu0 0.0
    %751 = vmatpush.msra.mxu0 0.0
    %752 = vmatpush.msra.mxu0 0.0
    %753 = vmatpush.msra.mxu0 0.0
    %754 = vmatpush.msra.mxu0 %v130
    %755 = vmatpush.msra.mxu0 %v129
    %756 = vmatpush.msra.mxu0 %v128
    %757 = vmatpush.msra.mxu0 %v127
    %758 = vmatmul.f32.gmra.mxu0 %v740
    %v759 = vpop.f32.mrf.mxu0
    %v760 = vadd.f32 0.0, %v759
    %761 = vdwg.mxu0
    %v763 = vrot.slane %v760, 2
    %v764 = vrot.slane %v760, 3
    %v767 = vadd.f32 %v122, %v763
    %v768 = vadd.f32 %v125, %v764
    %v769 = vmul.f32 %v767, %v138
    %v770 = vmul.f32 %v768, %v138
    %v771 = vtanh.pop %v769
    %v772 = vtanh.pop %v770
    %v773 = vmul.f32 %v771, %v138
    %v774 = vmul.f32 %v772, %v138
    %v775 = vadd.f32 %v773, %v139
    %v776 = vadd.f32 %v774, %v139
    %v779 = vrot.slane %v702, 7
    %v780 = vrot.slane %v703, 7
    %v783 = vmul.f32 %v775, %v779
    %v784 = vmul.f32 %v776, %v780
    %787 = vrot.lane.b32.xlu0 %v775, 64
    %v788 = vpop.permute.xlu0 %787
    %789 = vrot.lane.b32.xlu0 %v776, 64
    %v790 = vpop.permute.xlu0 %789
    %v793 = vmul.f32 %v775, %v788
    %v794 = vmul.f32 %v776, %v790
    %797 = vrot.lane.b32.xlu0 %v793, 32
    %v798 = vpop.permute.xlu0 %797
    %799 = vrot.lane.b32.xlu0 %v794, 32
    %v800 = vpop.permute.xlu0 %799
    %v803 = vadd.f32 %v783, %v798
    %v804 = vadd.f32 %v784, %v800
    %v805 = vtanh.pop %v803
    %v806 = vtanh.pop %v804
    %809 = vrot.lane.b32.xlu0 %v805, 64
    %v810 = vpop.permute.xlu0 %809
    %811 = vrot.lane.b32.xlu0 %v806, 64
    %v812 = vpop.permute.xlu0 %811
    %v815 = vmul.f32 %v775, %v810
    %v816 = vmul.f32 %v776, %v812
    %819 = vst.sshfl [vmem:[#allocation1] sm:$0xff pattern:$0x73625140] %v815
    %s820 = scalar_lea.vmem [#allocation1], 3
    %v821 = vld [vmem:[%s820] ss:$4 sm:$0xff]
    %822 = vst.sshfl [vmem:[#allocation1 + $0x20] sm:$0xff pattern:$0x73625140] %v816
    %s823 = scalar_lea.vmem [#allocation1], 35
    %v824 = vld [vmem:[%s823] ss:$4 sm:$0xff]
    %v825 = vsel %vm222, %v821, %v821
    %v826 = vsel %vm224, %v821, %v825
    %v827 = vrot.slane %v824, 7
    %v828 = vsel %vm227, %v827, %v826
    %v829 = vsel %vm229, %v827, %v828
    %v830 = vsel %vm231, %v827, %v829
    %v831 = vsel %vm233, %v827, %v830
    %832 = vrot.lane.b32.xlu0 %v831, 96
    %v833 = vpop.permute.xlu0 %832
    %835 = vst.msk [vmem:[%s6 + $0x2] sm:$0x3] %vm431, %v833
    %v836 = vrot.slane %v815, 6
    %v837 = vrot.slane %v816, 5
    %v838 = vsel %vm227, %v837, %v836
    %839 = vrot.lane.b32.xlu0 %v838, 32
    %v840 = vpop.permute.xlu0 %839
    %v841 = vsel %vm140, %v840, 0
    %843 = vmatpush.msra.mxu0 0.0
    %844 = vmatpush.msra.mxu0 0.0
    %845 = vmatpush.msra.mxu0 0.0
    %846 = vmatpush.msra.mxu0 0.0
    %847 = vmatpush.msra.mxu0 0.0
    %848 = vmatpush.msra.mxu0 0.0
    %849 = vmatpush.msra.mxu0 0.0
    %850 = vmatpush.msra.mxu0 0.0
    %851 = vmatpush.msra.mxu0 0.0
    %852 = vmatpush.msra.mxu0 0.0
    %853 = vmatpush.msra.mxu0 0.0
    %854 = vmatpush.msra.mxu0 0.0
    %855 = vmatpush.msra.mxu0 %v130
    %856 = vmatpush.msra.mxu0 %v129
    %857 = vmatpush.msra.mxu0 %v128
    %858 = vmatpush.msra.mxu0 %v127
    %859 = vmatmul.f32.gmra.mxu0 %v841
    %v860 = vpop.f32.mrf.mxu0
    %v861 = vadd.f32 0.0, %v860
    %862 = vdwg.mxu0
    %v864 = vrot.slane %v861, 1
    %v865 = vrot.slane %v861, 2
    %v868 = vadd.f32 %v122, %v864
    %v869 = vadd.f32 %v125, %v865
    %v870 = vmul.f32 %v868, %v138
    %v871 = vmul.f32 %v869, %v138
    %v872 = vtanh.pop %v870
    %v873 = vtanh.pop %v871
    %v874 = vmul.f32 %v872, %v138
    %v875 = vmul.f32 %v873, %v138
    %v876 = vadd.f32 %v874, %v139
    %v877 = vadd.f32 %v875, %v139
    %v880 = vrot.slane %v803, 7
    %v881 = vrot.slane %v804, 7
    %v884 = vmul.f32 %v876, %v880
    %v885 = vmul.f32 %v877, %v881
    %888 = vrot.lane.b32.xlu0 %v876, 64
    %v889 = vpop.permute.xlu0 %888
    %890 = vrot.lane.b32.xlu0 %v877, 64
    %v891 = vpop.permute.xlu0 %890
    %v894 = vmul.f32 %v876, %v889
    %v895 = vmul.f32 %v877, %v891
    %898 = vrot.lane.b32.xlu0 %v894, 32
    %v899 = vpop.permute.xlu0 %898
    %900 = vrot.lane.b32.xlu0 %v895, 32
    %v901 = vpop.permute.xlu0 %900
    %v904 = vadd.f32 %v884, %v899
    %v905 = vadd.f32 %v885, %v901
    %v906 = vtanh.pop %v904
    %v907 = vtanh.pop %v905
    %910 = vrot.lane.b32.xlu0 %v906, 64
    %v911 = vpop.permute.xlu0 %910
    %912 = vrot.lane.b32.xlu0 %v907, 64
    %v913 = vpop.permute.xlu0 %912
    %v916 = vmul.f32 %v876, %v911
    %v917 = vmul.f32 %v877, %v913
    %920 = vst.sshfl [vmem:[#allocation1] sm:$0xff pattern:$0x73625140] %v916
    %s921 = scalar_lea.vmem [#allocation1], 3
    %v922 = vld [vmem:[%s921] ss:$4 sm:$0xff]
    %923 = vst.sshfl [vmem:[#allocation1 + $0x20] sm:$0xff pattern:$0x73625140] %v917
    %s924 = scalar_lea.vmem [#allocation1], 35
    %v925 = vld [vmem:[%s924] ss:$4 sm:$0xff]
    %v926 = vrot.slane %v922, 1
    %v927 = vsel %vm222, %v926, %v926
    %v928 = vsel %vm224, %v926, %v927
    %v929 = vsel %vm227, %v925, %v928
    %v930 = vsel %vm229, %v925, %v929
    %v931 = vsel %vm231, %v925, %v930
    %v932 = vsel %vm233, %v925, %v931
    %934 = vst.msk [vmem:[%s6 + $0x2] sm:$0x3] %vm531, %v932
    %v935 = vrot.slane %v917, 7
    %936 = vrot.lane.b32.xlu0 %v916, 32
    %v937 = vpop.permute.xlu0 %936
    %938 = vrot.lane.b32.xlu0 %v935, 32
    %v939 = vpop.permute.xlu0 %938
    %vm942 = vcmask 261127
    %943 = vst.msk [vmem:[#allocation10 - $0x7] sm:$0x80] %vm942, %v937
    %vm944 = vcmask 253952
    %945 = vst.msk [vmem:[#allocation10 + $0x1] sm:$0x1] %vm944, %v939
    %v948 = vrot.slane %v905, 7
    %949 = vrot.lane.b32.xlu0 %v904, 96
    %v950 = vpop.permute.xlu0 %949
    %951 = vrot.lane.b32.xlu0 %v948, 96
    %v952 = vpop.permute.xlu0 %951
    %955 = vst.msk [vmem:[#allocation11 - $0x7] sm:$0x80] %vm942, %v950
    %956 = vst.msk [vmem:[#allocation11 + $0x1] sm:$0x1] %vm944, %v952
    // Predicated region
    $region42: #{encoder_forward.1} parent=1 // pred_check
      _
    $region43: #{encoder_forward.1} parent=1 // pred_check_branch
      %958 = sbr.rel (0) target = $region45
    $region44: #{encoder_forward.1} parent=1 // pred_region
      _
    $region45: #{encoder_forward.1} parent=1 // pred_fallthru
      _
    // Predicated region
    $region46: #{encoder_forward.1} parent=1 // pred_check
      _
    $region47: #{encoder_forward.1} parent=1 // pred_check_branch
      %960 = sbr.rel (0) target = $region49
    $region48: #{encoder_forward.1} parent=1 // pred_region
      %962 = vsyncadd [#allocation4], 0
      %s964 = sshll.u32 [#allocation10], 4
      %s965 = int_to_ptr.vmem [resolvable:$true] %s964
      %s966 = sshll.u32 %s7, 4
      %s967 = int_to_ptr.hbm [resolvable:$true] %s966
      %969 = dma.vmem_to_hbm [thread:$0]  %s965, 32, %s967, [#allocation4]
    $region49: #{encoder_forward.1} parent=1 // pred_fallthru
      _
    // Predicated region
    $region50: #{encoder_forward.1} parent=1 // pred_check
      _
    $region51: #{encoder_forward.1} parent=1 // pred_check_branch
      %971 = sbr.rel (0) target = $region53
    $region52: #{encoder_forward.1} parent=1 // pred_region
      %973 = vsyncadd [#allocation12], 0
      %s975 = sshll.u32 [#allocation11], 4
      %s976 = int_to_ptr.vmem [resolvable:$true] %s975
      %s977 = sshll.u32 %s8, 4
      %s978 = int_to_ptr.hbm [resolvable:$true] %s977
      %980 = dma.vmem_to_hbm [thread:$0]  %s976, 32, %s978, [#allocation12]
    $region53: #{encoder_forward.1} parent=1 // pred_fallthru
      _
    // Predicated region
    $region54: #{encoder_forward.1} parent=1 // pred_check
      _
    $region55: #{encoder_forward.1} parent=1 // pred_check_branch
      %982 = sbr.rel (0) target = $region57
    $region56: #{encoder_forward.1} parent=1 // pred_region
      _
    $region57: #{encoder_forward.1} parent=1 // pred_fallthru
      _
    // Predicated region
    $region58: #{encoder_forward.1} parent=1 // pred_check
      _
    $region59: #{encoder_forward.1} parent=1 // pred_check_branch
      %984 = sbr.rel (0) target = $region61
    $region60: #{encoder_forward.1} parent=1 // pred_region
      %986 = dma.done [#allocation4], 32
    $region61: #{encoder_forward.1} parent=1 // pred_fallthru
      _
    // Predicated region
    $region62: #{encoder_forward.1} parent=1 // pred_check
      _
    $region63: #{encoder_forward.1} parent=1 // pred_check_branch
      %988 = sbr.rel (0) target = $region65
    $region64: #{encoder_forward.1} parent=1 // pred_region
      %990 = dma.done [#allocation12], 32
    $region65: #{encoder_forward.1} parent=1 // pred_fallthru
      _
    %991 = vsyncpa [#allocation3], 1
    %992 = vsyncpa [#allocation6], 1
    %993 = vsyncpa [#allocation9], 1
    %994 = vsyncpa [#allocation4], 1
    %995 = vsyncpa [#allocation12], 1

</llo_original>
